<compile_context>
chip_gen: v6e
topology: v6e:2x2x1
jax: 0.10.0
libtpu: 0.0.40
codegen_flags: <defaults>
</compile_context>

<pallas_src>
import functools

import jax
import jax.numpy as jnp
from jax.experimental import pallas as pl
from jax.experimental.pallas import tpu as pltpu


def _round_up(x, m):
    return ((x + m - 1) // m) * m


def _cdiv(a, b):
    return -(-a // b)


def _disc_adv_loss_kernel(x_ref, w1_ref, b1_ref, w2t_ref, b2_ref, o_ref,
                          pre_ref, *, total_batch: int, tile_b: int,
                          tile_f: int, feat: int, w1_resident: bool,
                          mask_tail: bool):
    """Grid = (batch tiles ["parallel"], K tiles over features ["arbitrary"]).

    Accumulates the layer-1 partial products in a (tile_b, H) VMEM scratch
    across K; at the last K step runs relu -> layer-2 lane reduce -> softplus,
    masks batch-padding rows and writes this tile's partial sum (broadcast
    lane-dense) to its own output block.
    """
    i = pl.program_id(0)                    # batch-tile index
    k = pl.program_id(1)                    # feature (K) tile index
    nk = pl.num_programs(1)

    @pl.when(k == 0)
    def _():
        pre_ref[...] = jnp.zeros_like(pre_ref)

    # In-kernel cast to bf16 (VPU has slack; avoids a separate XLA pass on x).
    x_tile = x_ref[...].astype(jnp.bfloat16)
    if mask_tail:
        # Columns past the true feature dim (Pallas-padded garbage) -> 0.
        col = k * tile_f + jax.lax.broadcasted_iota(jnp.int32, x_tile.shape, 1)
        x_tile = jnp.where(col < feat, x_tile, jnp.zeros_like(x_tile))

    if w1_resident:
        k0 = pl.multiple_of(k * tile_f, tile_f)
        w1_tile = w1_ref[pl.ds(k0, tile_f), :]
    else:
        w1_tile = w1_ref[...]

    # Layer 1 partial product on the MXU (bf16 x bf16 -> f32 accumulate).
    pre_ref[...] += jnp.dot(x_tile, w1_tile,
                            preferred_element_type=jnp.float32)

    @pl.when(k == nk - 1)
    def _():
        h = jnp.maximum(pre_ref[...] + b1_ref[...], 0.0)          # (tile_b, H)
        # Layer 2: lane-dense (1, H) weights -> VPU mul + XLU lane reduce.
        logit = jnp.sum(h * w2t_ref[...], axis=-1, keepdims=True) + b2_ref[0]
        # -log(1 - sigmoid(logit)) == softplus(logit), numerically stable form.
        sp = jnp.maximum(logit, 0.0) + jnp.log(1.0 + jnp.exp(-jnp.abs(logit)))
        # Mask rows that only exist because of batch-tile padding.
        row = i * tile_b + jax.lax.broadcasted_iota(jnp.int32, sp.shape, 0)
        tile_sum = jnp.sum(jnp.where(row < total_batch, sp, 0.0))
        # Lane-dense per-tile partial-sum output (own block per batch tile so
        # the batch axis can be "parallel" across TensorCores).
        o_ref[...] = jnp.full(o_ref.shape, tile_sum, dtype=jnp.float32)


def disc_adv_loss(x, w1, b1, w2, b2, *, tile_b=None, tile_f=None):
    """mean(softplus(relu(x @ w1 + b1) @ w2 + b2)) as a single Pallas kernel.

    Mathematically identical to mean(-log(1 - sigmoid(...))) from the module.
    """
    x = jnp.asarray(x)
    if x.dtype not in (jnp.float32, jnp.bfloat16):
        x = x.astype(jnp.float32)
    B, F = x.shape
    H = int(w1.shape[1])
    x_bytes = jnp.dtype(x.dtype).itemsize

    # ---- batch tiling (>=2 tiles for large B so megacore/v7x gets both TCs) --
    if tile_b is None:
        if B <= 256:
            tile_b = _round_up(B, 8)
        else:
            tile_b = min(512, _round_up(_cdiv(B, 2), 8))
    tile_b = max(8, _round_up(int(tile_b), 8))
    nb = _cdiv(B, tile_b)

    # ---- generation-aware VMEM budget ---------------------------------------
    try:
        vmem_cap = int(pltpu.get_tpu_info().vmem_capacity_bytes)
    except Exception:
        vmem_cap = 64 * 1024 * 1024            # v7x-safe fallback
    if vmem_cap < 16 * 1024 * 1024:
        vmem_cap = 64 * 1024 * 1024
    budget = (vmem_cap * 3) // 4 - 4 * 1024 * 1024

    # ---- w1 residency + feature (K) tiling under the budget -----------------
    F_pad0 = _round_up(F, 128)
    w1_resident = (2 * F_pad0 * H * 2) <= min(16 * 1024 * 1024, budget // 4)

    fixed = tile_b * H * 4 + 4 * H * 4 + 64 * 1024   # pre_ref + b1/w2t + slack
    if w1_resident:
        fixed += 2 * F_pad0 * H * 2                  # resident w1 (dbl-buffered)
    per_col = tile_b * (2 * x_bytes + 2)             # x dbl-buffer + bf16 copy
    if not w1_resident:
        per_col += 2 * H * 2                         # streamed w1 K-tile

    if tile_f is None:
        avail = max(budget - fixed, 128 * per_col)
        tile_f_max = max(128, (avail // per_col) // 128 * 128)
        if F <= 128 or tile_f_max >= F:
            tile_f = F                               # single K tile, no tail
        else:
            best = 0
            if F % 128 == 0:                         # prefer exact divisors
                d = tile_f_max
                while d >= 128:
                    if F % d == 0:
                        best = d
                        break
                    d -= 128
            tile_f = best if best else tile_f_max    # else mask the K tail
    tile_f = int(tile_f)
    nk = _cdiv(F, tile_f)
    F_pad = nk * tile_f
    mask_tail = F_pad > F

    # ---- small operands: prep once in the wrapper (cheap vs. x traffic) -----
    w1_f = jnp.asarray(w1, jnp.float32)
    if F_pad != F:
        w1_f = jnp.pad(w1_f, ((0, F_pad - F), (0, 0)))   # zero rows for K tail
    w1_bf = w1_f.astype(jnp.bfloat16)
    b1_r = jnp.asarray(b1, jnp.float32).reshape(1, H)
    w2t = jnp.asarray(w2, jnp.float32).reshape(1, H)      # lane-dense (1, H)
    b2_s = jnp.asarray(b2, jnp.float32).reshape((1,))     # scalar -> SMEM

    if w1_resident:
        w1_spec = pl.BlockSpec((F_pad, H), lambda i, k: (0, 0))
    else:
        # TODO(synk): huge-F fallback re-streams w1 per batch tile; acceptable
        #             only when w1 cannot be VMEM-resident.
        w1_spec = pl.BlockSpec((tile_f, H), lambda i, k: (k, 0))

    kernel = functools.partial(
        _disc_adv_loss_kernel, total_batch=B, tile_b=tile_b, tile_f=tile_f,
        feat=F, w1_resident=w1_resident, mask_tail=mask_tail)

    # Exact-ish VMEM footprint -> limit (capped at the physical capacity).
    footprint = (2 * tile_b * tile_f * x_bytes          # x, double-buffered
                 + tile_b * tile_f * 2                  # in-kernel bf16 copy
                 + (2 * F_pad * H * 2 if w1_resident else 2 * tile_f * H * 2)
                 + tile_b * H * 4                       # pre_ref scratch
                 + tile_b * (H + 8) * 4                 # epilogue temps
                 + 4 * H * 4 + 2 * 8 * 128 * 4)         # b1/w2t + out blocks
    if mask_tail:
        footprint += tile_b * tile_f * 4                # column-iota temp
    vmem_limit = int(min(vmem_cap,
                         max(32 * 1024 * 1024, footprint + 8 * 1024 * 1024)))

    cost = pl.CostEstimate(
        flops=2 * nb * tile_b * F_pad * H + 4 * nb * tile_b * H,
        transcendentals=2 * nb * tile_b,
        bytes_accessed=B * F * x_bytes + F_pad * H * 2 + 2 * H * 4
        + nb * 8 * 128 * 4,
    )

    out = pl.pallas_call(
        kernel,
        out_shape=jax.ShapeDtypeStruct((nb, 8, 128), jnp.float32),
        grid_spec=pltpu.PrefetchScalarGridSpec(
            num_scalar_prefetch=0,
            grid=(nb, nk),
            in_specs=[
                pl.BlockSpec((tile_b, tile_f), lambda i, k: (i, k)),  # x tile
                w1_spec,                                              # w1
                pl.BlockSpec((1, H), lambda i, k: (0, 0)),            # b1
                pl.BlockSpec((1, H), lambda i, k: (0, 0)),            # w2^T
                pl.BlockSpec(memory_space=pltpu.MemorySpace.SMEM),    # b2
            ],
            out_specs=pl.BlockSpec((1, 8, 128), lambda i, k: (i, 0, 0)),
            scratch_shapes=[
                pltpu.VMEM((tile_b, H), jnp.float32),   # layer-1 acc over K
            ],
        ),
        compiler_params=pltpu.CompilerParams(
            dimension_semantics=("parallel", "arbitrary"),
            vmem_limit_bytes=vmem_limit,
        ),
        cost_estimate=cost,
    )(x, w1_bf, b1_r, w2t, b2_s)

    # Tiny final reduction over per-batch-tile partial sums (plain XLA).
    return jnp.sum(out[:, 0, 0]) / jnp.float32(B)


def discriminator_loss(xr, zf, real_params, fake_params):
    """LD = mean(-log(1 - D_real(xr))) + mean(-log(1 - D_fake(zf)))"""
    xr_flat = xr.reshape(xr.shape[0], -1)
    zf_flat = zf.reshape(zf.shape[0], -1)
    adv_loss_real = disc_adv_loss(xr_flat, *real_params)
    adv_loss_fake = disc_adv_loss(zf_flat, *fake_params)
    return adv_loss_real + adv_loss_fake


def _make_disc_params(key, in_features, hidden):
    k1, k2 = jax.random.split(key)
    w1 = (jax.random.normal(k1, (in_features, hidden), jnp.float32)
          * (0.02 / jnp.sqrt(in_features)))
    b1 = jnp.zeros((1, hidden), jnp.float32)
    w2 = (jax.random.normal(k2, (hidden, 1), jnp.float32)
          * (0.02 / jnp.sqrt(hidden)))
    b2 = jnp.zeros((1, 1), jnp.float32)
    return (w1, b1, w2, b2)


def _reference_adv(x, params):
    """Pure-JAX reference for one discriminator term (bf16-matched matmul)."""
    w1, b1, w2, b2 = params
    xb = x.reshape(x.shape[0], -1).astype(jnp.bfloat16).astype(jnp.float32)
    w1b = jnp.asarray(w1, jnp.float32).astype(jnp.bfloat16).astype(jnp.float32)
    h = jnp.maximum(
        jnp.dot(xb, w1b, precision=jax.lax.Precision.HIGHEST)
        + b1.reshape(1, -1), 0.0)
    logit = jnp.dot(h, w2.reshape(-1, 1),
                    precision=jax.lax.Precision.HIGHEST) + b2.reshape(1, 1)
    # -log(1 - sigmoid(logit)) == softplus(logit)
    return jnp.mean(jax.nn.softplus(logit))


def _reference_loss(xr, zf, real_params, fake_params):
    return _reference_adv(xr, real_params) + _reference_adv(zf, fake_params)


if __name__ == "__main__":
    key = jax.random.PRNGKey(0)
    k_xr, k_zf, k_dr, k_df, k_x2, k_d2 = jax.random.split(key, 6)

    # Small deterministic inputs: xr is an NCHW image batch, zf a latent batch.
    N, C, Himg, Wimg = 2, 4, 16, 16
    Z = 32
    HIDDEN = 128

    xr = jax.random.normal(k_xr, (N, C, Himg, Wimg), jnp.float32)
    zf = jax.random.normal(k_zf, (N, Z), jnp.float32)

    real_params = _make_disc_params(k_dr, C * Himg * Wimg, HIDDEN)
    fake_params = _make_disc_params(k_df, Z, HIDDEN)

    ld = discriminator_loss(xr, zf, real_params, fake_params)
    ld = jax.block_until_ready(ld)
    ref = _reference_loss(xr, zf, real_params, fake_params)
    assert jnp.allclose(ld, ref, rtol=2e-3, atol=2e-3), (ld, ref)

    # Secondary check: multiple batch tiles with tail masking (B=640 -> two
    # 320-row tiles), resident w1, and a large feature dim (F=8192).
    B2, F2 = 640, 8192
    x2 = jax.random.normal(k_x2, (B2, F2), jnp.float32)
    p2 = _make_disc_params(k_d2, F2, HIDDEN)
    got2 = jax.block_until_ready(disc_adv_loss(x2, *p2))
    ref2 = _reference_adv(x2, p2)
    assert jnp.allclose(got2, ref2, rtol=2e-3, atol=2e-3), (got2, ref2)

    print("KERNEL_OK")
</pallas_src>

<mosaic_0001>
module attributes {stable_mosaic.version = 11 : i64} {
  func.func @_disc_adv_loss_kernel(%arg0: i32, %arg1: i32, %arg2: memref<8x1024xf32, #tpu.memory_space<vmem>>, %arg3: memref<1024x128xbf16, #tpu.memory_space<vmem>>, %arg4: memref<1x128xf32, #tpu.memory_space<vmem>>, %arg5: memref<1x128xf32, #tpu.memory_space<vmem>>, %arg6: memref<1xf32, #tpu.memory_space<smem>>, %arg7: memref<1x8x128xf32, #tpu.memory_space<vmem>>, %arg8: memref<8x128xf32, #tpu.memory_space<vmem>>) attributes {dimension_semantics = [#tpu.dimension_semantics<parallel>, #tpu.dimension_semantics<arbitrary>], iteration_bounds = array<i64: 1, 1>, scalar_prefetch = 0 : i64, scratch_operands = 1 : i64, tpu.core_type = #tpu.core_type<tc>, window_params = [{transform_indices = @transform_0, window_bounds = array<i64: 8, 1024>}, {pipeline_mode = #tpu.pipeline_mode<synchronous>, transform_indices = @transform_1, window_bounds = array<i64: 1024, 128>}, {pipeline_mode = #tpu.pipeline_mode<synchronous>, transform_indices = @transform_2, window_bounds = array<i64: 1, 128>}, {pipeline_mode = #tpu.pipeline_mode<synchronous>, transform_indices = @transform_3, window_bounds = array<i64: 1, 128>}, {transform_indices = @transform_4, window_bounds = array<i64: 1>}, {transform_indices = @transform_5, window_bounds = array<i64: 1, 8, 128>}]} {
    %c0_i32 = arith.constant 0 : i32
    %0 = arith.cmpi eq, %arg1, %c0_i32 : i32
    %1 = arith.extui %0 : i1 to i32
    %c0_i32_0 = arith.constant 0 : i32
    %2 = arith.cmpi ne, %1, %c0_i32_0 : i32
    scf.if %2 {
      %cst_9 = arith.constant 0.000000e+00 : f32
      %16 = vector.broadcast %cst_9 : f32 to vector<8x128xf32>
      %c0_10 = arith.constant 0 : index
      %c0_11 = arith.constant 0 : index
      %17 = vector.load %arg8[%c0_10, %c0_11] : memref<8x128xf32, #tpu.memory_space<vmem>>, vector<8x128xf32>
      tpu.vector_store %arg8[%c0_10, %c0_11], %16 {strides = array<i32>} : memref<8x128xf32, #tpu.memory_space<vmem>>, vector<8x128xf32>,
    } else {
    }
    %c0 = arith.constant 0 : index
    %c0_1 = arith.constant 0 : index
    %3 = vector.load %arg2[%c0, %c0_1] : memref<8x1024xf32, #tpu.memory_space<vmem>>, vector<8x1024xf32>
    %4 = arith.truncf %3 : vector<8x1024xf32> to vector<8x1024xbf16>
    %c1024_i32 = arith.constant 1024 : i32
    %5 = arith.muli %arg1, %c1024_i32 : i32
    %6 = tpu.assume_multiple %5, 1024 : i32
    %7 = arith.index_cast %6 : i32 to index
    %c0_2 = arith.constant 0 : index
    %8 = vector.load %arg3[%7, %c0_2] : memref<1024x128xbf16, #tpu.memory_space<vmem>>, vector<1024x128xbf16>
    %c0_3 = arith.constant 0 : index
    %c0_4 = arith.constant 0 : index
    %9 = vector.load %arg8[%c0_3, %c0_4] : memref<8x128xf32, #tpu.memory_space<vmem>>, vector<8x128xf32>
    %cst = arith.constant dense<0.000000e+00> : vector<8x128xf32>
    %10 = tpu.matmul %4, %8, %cst {dimension_numbers = #tpu.dot_dimension_numbers<[1], [0], [0], [1], [0, 0, 1, 1], [], []>} : vector<8x1024xbf16>, vector<1024x128xbf16>, vector<8x128xf32> -> vector<8x128xf32>
    %11 = arith.addf %9, %10 : vector<8x128xf32>
    %c0_5 = arith.constant 0 : index
    %c0_6 = arith.constant 0 : index
    %12 = vector.load %arg8[%c0_5, %c0_6] : memref<8x128xf32, #tpu.memory_space<vmem>>, vector<8x128xf32>
    tpu.vector_store %arg8[%c0_5, %c0_6], %11 {strides = array<i32>} : memref<8x128xf32, #tpu.memory_space<vmem>>, vector<8x128xf32>,
    %c0_i32_7 = arith.constant 0 : i32
    %13 = arith.cmpi eq, %arg1, %c0_i32_7 : i32
    %14 = arith.extui %13 : i1 to i32
    %c0_i32_8 = arith.constant 0 : i32
    %15 = arith.cmpi ne, %14, %c0_i32_8 : i32
    scf.if %15 {
      %c0_9 = arith.constant 0 : index
      %c0_10 = arith.constant 0 : index
      %16 = vector.load %arg8[%c0_9, %c0_10] : memref<8x128xf32, #tpu.memory_space<vmem>>, vector<8x128xf32>
      %c0_11 = arith.constant 0 : index
      %c0_12 = arith.constant 0 : index
      %17 = vector.load %arg4[%c0_11, %c0_12] : memref<1x128xf32, #tpu.memory_space<vmem>>, vector<1x128xf32>
      %18 = vector.broadcast %17 : vector<1x128xf32> to vector<8x128xf32>
      %19 = arith.addf %16, %18 : vector<8x128xf32>
      %cst_13 = arith.constant 0.000000e+00 : f32
      %20 = vector.broadcast %cst_13 : f32 to vector<8x128xf32>
      %21 = arith.maximumf %19, %20 : vector<8x128xf32>
      %c0_14 = arith.constant 0 : index
      %c0_15 = arith.constant 0 : index
      %22 = vector.load %arg5[%c0_14, %c0_15] : memref<1x128xf32, #tpu.memory_space<vmem>>, vector<1x128xf32>
      %23 = vector.broadcast %22 : vector<1x128xf32> to vector<8x128xf32>
      %24 = arith.mulf %21, %23 : vector<8x128xf32>
      %cst_16 = arith.constant dense<0.000000e+00> : vector<8xf32>
      %25 = vector.multi_reduction <add>, %24, %cst_16 [1] : vector<8x128xf32> to vector<8xf32>
      %26 = vector.shape_cast %25 : vector<8xf32> to vector<8x1xf32>
      %c0_17 = arith.constant 0 : index
      %27 = memref.load %arg6[%c0_17] : memref<1xf32, #tpu.memory_space<smem>>
      %28 = vector.broadcast %27 : f32 to vector<8x1xf32>
      %29 = arith.addf %26, %28 : vector<8x1xf32>
      %cst_18 = arith.constant 0.000000e+00 : f32
      %30 = vector.broadcast %cst_18 : f32 to vector<8x1xf32>
      %31 = arith.maximumf %29, %30 : vector<8x1xf32>
      %32 = math.absf %29 : vector<8x1xf32>
      %cst_19 = arith.constant 0.000000e+00 : f32
      %33 = vector.broadcast %cst_19 : f32 to vector<8x1xf32>
      %34 = arith.subf %33, %32 : vector<8x1xf32>
      %35 = math.exp %34 : vector<8x1xf32>
      %cst_20 = arith.constant 1.000000e+00 : f32
      %36 = vector.broadcast %cst_20 : f32 to vector<8x1xf32>
      %37 = arith.addf %36, %35 : vector<8x1xf32>
      %38 = math.log %37 : vector<8x1xf32>
      %39 = arith.addf %31, %38 : vector<8x1xf32>
      %c8_i32 = arith.constant 8 : i32
      %40 = arith.muli %arg0, %c8_i32 : i32
      %41 = tpu.iota {dimensions = array<i32: 0>} : vector<8x1xi32>
      %42 = vector.broadcast %40 : i32 to vector<8x1xi32>
      %43 = arith.addi %42, %41 : vector<8x1xi32>
      %c2_i32 = arith.constant 2 : i32
      %44 = vector.broadcast %c2_i32 : i32 to vector<8x1xi32>
      %45 = arith.cmpi slt, %43, %44 : vector<8x1xi32>
      %cst_21 = arith.constant 0.000000e+00 : f32
      %46 = vector.broadcast %cst_21 : f32 to vector<8x1xf32>
      %47 = arith.select %45, %39, %46 : vector<8x1xi1>, vector<8x1xf32>
      %48 = vector.shape_cast %47 : vector<8x1xf32> to vector<1x8x1xf32>
      %cst_22 = arith.constant dense<0.000000e+00> : vector<1xf32>
      %49 = vector.multi_reduction <add>, %48, %cst_22 [1, 2] : vector<1x8x1xf32> to vector<1xf32>
      %50 = vector.shape_cast %49 : vector<1xf32> to vector<1x1x1xf32>
      %51 = vector.extract %50[0, 0, 0] : f32 from vector<1x1x1xf32>
      %52 = vector.broadcast %51 : f32 to vector<1x8x128xf32>
      %c0_23 = arith.constant 0 : index
      %c0_24 = arith.constant 0 : index
      %c0_25 = arith.constant 0 : index
      %53 = vector.load %arg7[%c0_23, %c0_24, %c0_25] : memref<1x8x128xf32, #tpu.memory_space<vmem>>, vector<1x8x128xf32>
      tpu.vector_store %arg7[%c0_23, %c0_24, %c0_25], %52 {strides = array<i32>} : memref<1x8x128xf32, #tpu.memory_space<vmem>>, vector<1x8x128xf32>,
    } else {
    }
    return
  }
  func.func @transform_0(%arg0: i32, %arg1: i32) -> (i32, i32) {
    %c0_i32 = arith.constant 0 : i32
    return %arg0, %arg1 : i32, i32
  }
  func.func @transform_1(%arg0: i32, %arg1: i32) -> (i32, i32) {
    %c0_i32 = arith.constant 0 : i32
    %c0_i32_0 = arith.constant 0 : i32
    %c0_i32_1 = arith.constant 0 : i32
    return %c0_i32, %c0_i32_0 : i32, i32
  }
  func.func @transform_2(%arg0: i32, %arg1: i32) -> (i32, i32) {
    %c0_i32 = arith.constant 0 : i32
    %c0_i32_0 = arith.constant 0 : i32
    %c0_i32_1 = arith.constant 0 : i32
    return %c0_i32, %c0_i32_0 : i32, i32
  }
  func.func @transform_3(%arg0: i32, %arg1: i32) -> (i32, i32) {
    %c0_i32 = arith.constant 0 : i32
    %c0_i32_0 = arith.constant 0 : i32
    %c0_i32_1 = arith.constant 0 : i32
    return %c0_i32, %c0_i32_0 : i32, i32
  }
  func.func @transform_4(%arg0: i32, %arg1: i32) -> i32 {
    %c0_i32 = arith.constant 0 : i32
    %c0_i32_0 = arith.constant 0 : i32
    return %c0_i32 : i32
  }
  func.func @transform_5(%arg0: i32, %arg1: i32) -> (i32, i32, i32) {
    %c0_i32 = arith.constant 0 : i32
    %c0_i32_0 = arith.constant 0 : i32
    %c0_i32_1 = arith.constant 0 : i32
    return %arg0, %c0_i32, %c0_i32_0 : i32, i32, i32
  }
}

</mosaic_0001>

<llo_original>
// kernel: tpu_custom_call.1
$region0: #{tpu_custom_call.1}
  #allocation0 [shape = 'u32[]', space=smem, size = 0x4, offset = 0x4, fixed_abs, tag = 'smem constant byte address 0x4 - core index']
  #allocation1 [shape = 'u32[144,128]{1,0:T(1,128)}', space=vmem, size = 0x12000, scoped, tag = 'internal scratch']
  #allocation2 [shape = 'f32[8,128]{1,0:T(8,128)}', space=vmem, size = 0x1000, scoped, tag = 'scratch operand']
  #allocation3 [shape = 'f32[1]{0:T(128)S(6)}', space=smem, size = 0x200, scoped, tag = 'scoped memory for tpu_custom_call.1']
  %s0 = inlined_call_operand.hbm [shape: f32[2,1024], index: 0, kind: input, shape index: {}]
  %s1 = inlined_call_operand.hbm [shape: bf16[1024,128], index: 1, kind: input, shape index: {}]
  %s2 = inlined_call_operand.vmem [shape: f32[1,128], index: 2, kind: input, shape index: {}]
  %s3 = inlined_call_operand.vmem [shape: f32[1,128], index: 3, kind: input, shape index: {}]
  %s4 = inlined_call_operand.<no memory space> [shape: f32[1], index: 4, kind: input, shape index: {}]
  %s5 = inlined_call_operand.hbm [shape: f32[1,8,128], index: 5, kind: output, shape index: {}]
  %s6 = sld [smem:[#allocation0]]
  $region46: #{tpu_custom_call.1} parent=0
    _
  %s8 = ssub.s32 1, %s6
  %s9 = scalar_select 0, %s8, %s6
  %10 = sst [smem:[#allocation3]] %s4
  $region1: #{tpu_custom_call.1} parent=0
    #allocation4 [shape = 'u8[32768]{0}', space=vmem, size = 0x8000, scoped, tag = 'input window, operand 0, single buffered']
    #allocation5 [shape = 's32[1]{0}', space=sflag, size = 0x4, scoped, tag = 'scoped memory for tpu_custom_call.1']
    #allocation6 [shape = 's32[1]{0}', space=sflag, size = 0x4, scoped, tag = 'scoped memory for tpu_custom_call.1']
    #allocation7 [shape = 'u8[262144]{0}', space=vmem, size = 0x40000, scoped, tag = 'input window, operand 1, single buffered']
    #allocation8 [shape = 's32[1]{0}', space=sflag, size = 0x4, scoped, tag = 'scoped memory for tpu_custom_call.1']
    #allocation9 [shape = 'u8[4096]{0}', space=vmem, size = 0x1000, scoped, tag = 'output window, operand 0, single buffered']
    %11 = vsyncpa [#allocation5], 0
    %12 = vsyncpa [#allocation8], 0
    %13 = vsyncpa [#allocation6], 0
    // Predicated region
    $region2: #{tpu_custom_call.1} parent=1 // pred_check
      _
    $region3: #{tpu_custom_call.1} parent=1 // pred_check_branch
      %15 = sbr.rel (0) target = $region5
    $region4: #{tpu_custom_call.1} parent=1 // pred_region
      %s17 = ssub.s32 1024, 256
      %18 = vsyncadd [#allocation5], %s17
      %s19 = sshll.u32 [#allocation4], 4
      %s20 = int_to_ptr.vmem [resolvable:$true] %s19
      %25 = dma.hbm_to_vmem [thread:$0]  %s0, 256, %s20, [#allocation5], 256, 256, 16
    $region5: #{tpu_custom_call.1} parent=1 // pred_fallthru
      _
    // Predicated region
    $region6: #{tpu_custom_call.1} parent=1 // pred_check
      _
    $region7: #{tpu_custom_call.1} parent=1 // pred_check_branch
      %27 = sbr.rel (0) target = $region9
    $region8: #{tpu_custom_call.1} parent=1 // pred_region
      %s29 = ssub.s32 8192, 8192
      %30 = vsyncadd [#allocation8], %s29
      %s31 = sshll.u32 [#allocation7], 4
      %s32 = int_to_ptr.vmem [resolvable:$true] %s31
      %37 = dma.hbm_to_vmem [thread:$0]  %s1, 8192, %s32, [#allocation8], 64, 64, 4
    $region9: #{tpu_custom_call.1} parent=1 // pred_fallthru
      _
    // Predicated region
    $region10: #{tpu_custom_call.1} parent=1 // pred_check
      _
    $region11: #{tpu_custom_call.1} parent=1 // pred_check_branch
      %39 = sbr.rel (0) target = $region13
    $region12: #{tpu_custom_call.1} parent=1 // pred_region
      _
    $region13: #{tpu_custom_call.1} parent=1 // pred_fallthru
      _
    // Predicated region
    $region14: #{tpu_custom_call.1} parent=1 // pred_check
      _
    $region15: #{tpu_custom_call.1} parent=1 // pred_check_branch
      %41 = sbr.rel (0) target = $region17
    $region16: #{tpu_custom_call.1} parent=1 // pred_region
      _
    $region17: #{tpu_custom_call.1} parent=1 // pred_fallthru
      _
    // Predicated region
    $region18: #{tpu_custom_call.1} parent=1 // pred_check
      _
    $region19: #{tpu_custom_call.1} parent=1 // pred_check_branch
      %43 = sbr.rel (0) target = $region21
    $region20: #{tpu_custom_call.1} parent=1 // pred_region
      _
    $region21: #{tpu_custom_call.1} parent=1 // pred_fallthru
      _
    // Predicated region
    $region22: #{tpu_custom_call.1} parent=1 // pred_check
      _
    $region23: #{tpu_custom_call.1} parent=1 // pred_check_branch
      %45 = sbr.rel (0) target = $region25
    $region24: #{tpu_custom_call.1} parent=1 // pred_region
      %46 = dma.done [#allocation5], 1024
    $region25: #{tpu_custom_call.1} parent=1 // pred_fallthru
      _
    // Predicated region
    $region26: #{tpu_custom_call.1} parent=1 // pred_check
      _
    $region27: #{tpu_custom_call.1} parent=1 // pred_check_branch
      %48 = sbr.rel (0) target = $region29
    $region28: #{tpu_custom_call.1} parent=1 // pred_region
      %49 = dma.done [#allocation8], 8192
    $region29: #{tpu_custom_call.1} parent=1 // pred_fallthru
      _
    %p51 = scmp.eq.s32.totalorder 0, 0
    // Predicated region
    $region30: #{tpu_custom_call.1} parent=1 // pred_check
      %p52 = pneg %p51
    $region31: #{tpu_custom_call.1} parent=1 // pred_check_branch
      %54 = sbr.rel (%p52) target = $region33
    $region32: #{tpu_custom_call.1} parent=1 // pred_region
      %55 = vst [vmem:[#allocation2] sm:$0xff] 0.0
    $region33: #{tpu_custom_call.1} parent=1 // pred_fallthru
      _
    %v56 = vld [vmem:[#allocation4] sm:$0xff]
    %v57 = vld [vmem:[#allocation4 + $0x8] sm:$0xff]
    %v58 = vld [vmem:[#allocation4 + $0x10] sm:$0xff]
    %v59 = vld [vmem:[#allocation4 + $0x18] sm:$0xff]
    %v60 = vld [vmem:[#allocation4 + $0x20] sm:$0xff]
    %v61 = vld [vmem:[#allocation4 + $0x28] sm:$0xff]
    %v62 = vld [vmem:[#allocation4 + $0x30] sm:$0xff]
    %v63 = vld [vmem:[#allocation4 + $0x38] sm:$0xff]
    %v72 = vcombine.low %v56, %v58
    %v73 = vcombine.high %v56, %v58
    %v74 = vcombine.low %v60, %v62
    %v75 = vcombine.high %v60, %v62
    %v77 = vunpack.c.l.s4 1983009808
    %v78 = vunpack.c.0.s8 %v77
    %v79 = vlaneseq
    %v80 = vshrl.u32 %v79, 7
    %v81 = vsub.s32 %v78, %v80
    %v82 = vrot.slane %v72, %v81
    %v84 = vunpack.c.l.s4 1983009808
    %v85 = vunpack.c.0.s8 %v84
    %v86 = vlaneseq
    %v87 = vshrl.u32 %v86, 7
    %v88 = vsub.s32 %v85, %v87
    %v89 = vrot.slane %v73, %v88
    %v91 = vunpack.c.l.s4 1983009808
    %v92 = vunpack.c.0.s8 %v91
    %v93 = vlaneseq
    %v94 = vshrl.u32 %v93, 7
    %v95 = vsub.s32 %v92, %v94
    %v96 = vrot.slane %v74, %v95
    %v98 = vunpack.c.l.s4 1983009808
    %v99 = vunpack.c.0.s8 %v98
    %v100 = vlaneseq
    %v101 = vshrl.u32 %v100, 7
    %v102 = vsub.s32 %v99, %v101
    %v103 = vrot.slane %v75, %v102
    %v104 = vcombine.low %v82, %v96
    %v105 = vcombine.high %v82, %v96
    %v106 = vcombine.low %v89, %v103
    %v107 = vcombine.high %v89, %v103
    %v108 = vcombine.low %v57, %v59
    %v109 = vcombine.high %v57, %v59
    %v110 = vcombine.low %v61, %v63
    %v111 = vcombine.high %v61, %v63
    %v113 = vunpack.c.l.s4 1983009808
    %v114 = vunpack.c.0.s8 %v113
    %v115 = vlaneseq
    %v116 = vshrl.u32 %v115, 7
    %v117 = vsub.s32 %v114, %v116
    %v118 = vrot.slane %v108, %v117
    %v120 = vunpack.c.l.s4 1983009808
    %v121 = vunpack.c.0.s8 %v120
    %v122 = vlaneseq
    %v123 = vshrl.u32 %v122, 7
    %v124 = vsub.s32 %v121, %v123
    %v125 = vrot.slane %v109, %v124
    %v127 = vunpack.c.l.s4 1983009808
    %v128 = vunpack.c.0.s8 %v127
    %v129 = vlaneseq
    %v130 = vshrl.u32 %v129, 7
    %v131 = vsub.s32 %v128, %v130
    %v132 = vrot.slane %v110, %v131
    %v134 = vunpack.c.l.s4 1983009808
    %v135 = vunpack.c.0.s8 %v134
    %v136 = vlaneseq
    %v137 = vshrl.u32 %v136, 7
    %v138 = vsub.s32 %v135, %v137
    %v139 = vrot.slane %v111, %v138
    %v140 = vcombine.low %v118, %v132
    %v141 = vcombine.high %v118, %v132
    %v142 = vcombine.low %v125, %v139
    %v143 = vcombine.high %v125, %v139
    %v152 = vpack.c.bf16 %v104, %v104
    %v153 = vpack.c.bf16 %v105, %v105
    %v154 = vpack.c.bf16 %v106, %v106
    %v155 = vpack.c.bf16 %v107, %v107
    %v156 = vpack.c.bf16 %v140, %v140
    %v157 = vpack.c.bf16 %v141, %v141
    %v158 = vpack.c.bf16 %v142, %v142
    %v159 = vpack.c.bf16 %v143, %v143
    %s160 = smul.u32 0, 1024
    %s161 = sshra.s32 %s160, 3
    %s162 = sand.u32 %s160, 7
    %s163 = smul.addr %s161, 4
    %s164 = scalar_lea.vmem [#allocation7], %s163
    %v165 = vld [vmem:[%s164] sm:$0xf]
    %v166 = vld [vmem:[%s164 + $0x4] sm:$0xf]
    %v167 = vld [vmem:[%s164 + $0x8] sm:$0xf]
    %v168 = vld [vmem:[%s164 + $0xc] sm:$0xf]
    %v169 = vld [vmem:[%s164 + $0x10] sm:$0xf]
    %v170 = vld [vmem:[%s164 + $0x14] sm:$0xf]
    %v171 = vld [vmem:[%s164 + $0x18] sm:$0xf]
    %v172 = vld [vmem:[%s164 + $0x1c] sm:$0xf]
    %v173 = vld [vmem:[%s164 + $0x20] sm:$0xf]
    %v174 = vld [vmem:[%s164 + $0x24] sm:$0xf]
    %v175 = vld [vmem:[%s164 + $0x28] sm:$0xf]
    %v176 = vld [vmem:[%s164 + $0x2c] sm:$0xf]
    %v177 = vld [vmem:[%s164 + $0x30] sm:$0xf]
    %v178 = vld [vmem:[%s164 + $0x34] sm:$0xf]
    %v179 = vld [vmem:[%s164 + $0x38] sm:$0xf]
    %v180 = vld [vmem:[%s164 + $0x3c] sm:$0xf]
    %v181 = vld [vmem:[%s164 + $0x40] sm:$0xf]
    %v182 = vld [vmem:[%s164 + $0x44] sm:$0xf]
    %v183 = vld [vmem:[%s164 + $0x48] sm:$0xf]
    %v184 = vld [vmem:[%s164 + $0x4c] sm:$0xf]
    %v185 = vld [vmem:[%s164 + $0x50] sm:$0xf]
    %v186 = vld [vmem:[%s164 + $0x54] sm:$0xf]
    %v187 = vld [vmem:[%s164 + $0x58] sm:$0xf]
    %v188 = vld [vmem:[%s164 + $0x5c] sm:$0xf]
    %v189 = vld [vmem:[%s164 + $0x60] sm:$0xf]
    %v190 = vld [vmem:[%s164 + $0x64] sm:$0xf]
    %v191 = vld [vmem:[%s164 + $0x68] sm:$0xf]
    %v192 = vld [vmem:[%s164 + $0x6c] sm:$0xf]
    %v193 = vld [vmem:[%s164 + $0x70] sm:$0xf]
    %v194 = vld [vmem:[%s164 + $0x74] sm:$0xf]
    %v195 = vld [vmem:[%s164 + $0x78] sm:$0xf]
    %v196 = vld [vmem:[%s164 + $0x7c] sm:$0xf]
    %v197 = vld [vmem:[%s164 + $0x80] sm:$0xf]
    %v198 = vld [vmem:[%s164 + $0x84] sm:$0xf]
    %v199 = vld [vmem:[%s164 + $0x88] sm:$0xf]
    %v200 = vld [vmem:[%s164 + $0x8c] sm:$0xf]
    %v201 = vld [vmem:[%s164 + $0x90] sm:$0xf]
    %v202 = vld [vmem:[%s164 + $0x94] sm:$0xf]
    %v203 = vld [vmem:[%s164 + $0x98] sm:$0xf]
    %v204 = vld [vmem:[%s164 + $0x9c] sm:$0xf]
    %v205 = vld [vmem:[%s164 + $0xa0] sm:$0xf]
    %v206 = vld [vmem:[%s164 + $0xa4] sm:$0xf]
    %v207 = vld [vmem:[%s164 + $0xa8] sm:$0xf]
    %v208 = vld [vmem:[%s164 + $0xac] sm:$0xf]
    %v209 = vld [vmem:[%s164 + $0xb0] sm:$0xf]
    %v210 = vld [vmem:[%s164 + $0xb4] sm:$0xf]
    %v211 = vld [vmem:[%s164 + $0xb8] sm:$0xf]
    %v212 = vld [vmem:[%s164 + $0xbc] sm:$0xf]
    %v213 = vld [vmem:[%s164 + $0xc0] sm:$0xf]
    %v214 = vld [vmem:[%s164 + $0xc4] sm:$0xf]
    %v215 = vld [vmem:[%s164 + $0xc8] sm:$0xf]
    %v216 = vld [vmem:[%s164 + $0xcc] sm:$0xf]
    %v217 = vld [vmem:[%s164 + $0xd0] sm:$0xf]
    %v218 = vld [vmem:[%s164 + $0xd4] sm:$0xf]
    %v219 = vld [vmem:[%s164 + $0xd8] sm:$0xf]
    %v220 = vld [vmem:[%s164 + $0xdc] sm:$0xf]
    %v221 = vld [vmem:[%s164 + $0xe0] sm:$0xf]
    %v222 = vld [vmem:[%s164 + $0xe4] sm:$0xf]
    %v223 = vld [vmem:[%s164 + $0xe8] sm:$0xf]
    %v224 = vld [vmem:[%s164 + $0xec] sm:$0xf]
    %v225 = vld [vmem:[%s164 + $0xf0] sm:$0xf]
    %v226 = vld [vmem:[%s164 + $0xf4] sm:$0xf]
    %v227 = vld [vmem:[%s164 + $0xf8] sm:$0xf]
    %v228 = vld [vmem:[%s164 + $0xfc] sm:$0xf]
    %v229 = vld [vmem:[%s164 + $0x100] sm:$0xf]
    %v230 = vld [vmem:[%s164 + $0x104] sm:$0xf]
    %v231 = vld [vmem:[%s164 + $0x108] sm:$0xf]
    %v232 = vld [vmem:[%s164 + $0x10c] sm:$0xf]
    %v233 = vld [vmem:[%s164 + $0x110] sm:$0xf]
    %v234 = vld [vmem:[%s164 + $0x114] sm:$0xf]
    %v235 = vld [vmem:[%s164 + $0x118] sm:$0xf]
    %v236 = vld [vmem:[%s164 + $0x11c] sm:$0xf]
    %v237 = vld [vmem:[%s164 + $0x120] sm:$0xf]
    %v238 = vld [vmem:[%s164 + $0x124] sm:$0xf]
    %v239 = vld [vmem:[%s164 + $0x128] sm:$0xf]
    %v240 = vld [vmem:[%s164 + $0x12c] sm:$0xf]
    %v241 = vld [vmem:[%s164 + $0x130] sm:$0xf]
    %v242 = vld [vmem:[%s164 + $0x134] sm:$0xf]
    %v243 = vld [vmem:[%s164 + $0x138] sm:$0xf]
    %v244 = vld [vmem:[%s164 + $0x13c] sm:$0xf]
    %v245 = vld [vmem:[%s164 + $0x140] sm:$0xf]
    %v246 = vld [vmem:[%s164 + $0x144] sm:$0xf]
    %v247 = vld [vmem:[%s164 + $0x148] sm:$0xf]
    %v248 = vld [vmem:[%s164 + $0x14c] sm:$0xf]
    %v249 = vld [vmem:[%s164 + $0x150] sm:$0xf]
    %v250 = vld [vmem:[%s164 + $0x154] sm:$0xf]
    %v251 = vld [vmem:[%s164 + $0x158] sm:$0xf]
    %v252 = vld [vmem:[%s164 + $0x15c] sm:$0xf]
    %v253 = vld [vmem:[%s164 + $0x160] sm:$0xf]
    %v254 = vld [vmem:[%s164 + $0x164] sm:$0xf]
    %v255 = vld [vmem:[%s164 + $0x168] sm:$0xf]
    %v256 = vld [vmem:[%s164 + $0x16c] sm:$0xf]
    %v257 = vld [vmem:[%s164 + $0x170] sm:$0xf]
    %v258 = vld [vmem:[%s164 + $0x174] sm:$0xf]
    %v259 = vld [vmem:[%s164 + $0x178] sm:$0xf]
    %v260 = vld [vmem:[%s164 + $0x17c] sm:$0xf]
    %v261 = vld [vmem:[%s164 + $0x180] sm:$0xf]
    %v262 = vld [vmem:[%s164 + $0x184] sm:$0xf]
    %v263 = vld [vmem:[%s164 + $0x188] sm:$0xf]
    %v264 = vld [vmem:[%s164 + $0x18c] sm:$0xf]
    %v265 = vld [vmem:[%s164 + $0x190] sm:$0xf]
    %v266 = vld [vmem:[%s164 + $0x194] sm:$0xf]
    %v267 = vld [vmem:[%s164 + $0x198] sm:$0xf]
    %v268 = vld [vmem:[%s164 + $0x19c] sm:$0xf]
    %v269 = vld [vmem:[%s164 + $0x1a0] sm:$0xf]
    %v270 = vld [vmem:[%s164 + $0x1a4] sm:$0xf]
    %v271 = vld [vmem:[%s164 + $0x1a8] sm:$0xf]
    %v272 = vld [vmem:[%s164 + $0x1ac] sm:$0xf]
    %v273 = vld [vmem:[%s164 + $0x1b0] sm:$0xf]
    %v274 = vld [vmem:[%s164 + $0x1b4] sm:$0xf]
    %v275 = vld [vmem:[%s164 + $0x1b8] sm:$0xf]
    %v276 = vld [vmem:[%s164 + $0x1bc] sm:$0xf]
    %v277 = vld [vmem:[%s164 + $0x1c0] sm:$0xf]
    %v278 = vld [vmem:[%s164 + $0x1c4] sm:$0xf]
    %v279 = vld [vmem:[%s164 + $0x1c8] sm:$0xf]
    %v280 = vld [vmem:[%s164 + $0x1cc] sm:$0xf]
    %v281 = vld [vmem:[%s164 + $0x1d0] sm:$0xf]
    %v282 = vld [vmem:[%s164 + $0x1d4] sm:$0xf]
    %v283 = vld [vmem:[%s164 + $0x1d8] sm:$0xf]
    %v284 = vld [vmem:[%s164 + $0x1dc] sm:$0xf]
    %v285 = vld [vmem:[%s164 + $0x1e0] sm:$0xf]
    %v286 = vld [vmem:[%s164 + $0x1e4] sm:$0xf]
    %v287 = vld [vmem:[%s164 + $0x1e8] sm:$0xf]
    %v288 = vld [vmem:[%s164 + $0x1ec] sm:$0xf]
    %v289 = vld [vmem:[%s164 + $0x1f0] sm:$0xf]
    %v290 = vld [vmem:[%s164 + $0x1f4] sm:$0xf]
    %v291 = vld [vmem:[%s164 + $0x1f8] sm:$0xf]
    %v292 = vld [vmem:[%s164 + $0x1fc] sm:$0xf]
    %v293 = vld [vmem:[#allocation2] sm:$0xff]
    %v422 = vunpack.c.l.b16 %v165
    %v423 = vunpack.c.l.b16 %v166
    %v424 = vunpack.c.l.b16 %v167
    %v425 = vunpack.c.l.b16 %v168
    %v426 = vunpack.c.l.b16 %v169
    %v427 = vunpack.c.l.b16 %v170
    %v428 = vunpack.c.l.b16 %v171
    %v429 = vunpack.c.l.b16 %v172
    %v430 = vunpack.c.l.b16 %v173
    %v431 = vunpack.c.l.b16 %v174
    %v432 = vunpack.c.l.b16 %v175
    %v433 = vunpack.c.l.b16 %v176
    %v434 = vunpack.c.l.b16 %v177
    %v435 = vunpack.c.l.b16 %v178
    %v436 = vunpack.c.l.b16 %v179
    %v437 = vunpack.c.l.b16 %v180
    %v438 = vunpack.c.l.b16 %v181
    %v439 = vunpack.c.l.b16 %v182
    %v440 = vunpack.c.l.b16 %v183
    %v441 = vunpack.c.l.b16 %v184
    %v442 = vunpack.c.l.b16 %v185
    %v443 = vunpack.c.l.b16 %v186
    %v444 = vunpack.c.l.b16 %v187
    %v445 = vunpack.c.l.b16 %v188
    %v446 = vunpack.c.l.b16 %v189
    %v447 = vunpack.c.l.b16 %v190
    %v448 = vunpack.c.l.b16 %v191
    %v449 = vunpack.c.l.b16 %v192
    %v450 = vunpack.c.l.b16 %v193
    %v451 = vunpack.c.l.b16 %v194
    %v452 = vunpack.c.l.b16 %v195
    %v453 = vunpack.c.l.b16 %v196
    %v454 = vunpack.c.l.b16 %v197
    %v455 = vunpack.c.l.b16 %v198
    %v456 = vunpack.c.l.b16 %v199
    %v457 = vunpack.c.l.b16 %v200
    %v458 = vunpack.c.l.b16 %v201
    %v459 = vunpack.c.l.b16 %v202
    %v460 = vunpack.c.l.b16 %v203
    %v461 = vunpack.c.l.b16 %v204
    %v462 = vunpack.c.l.b16 %v205
    %v463 = vunpack.c.l.b16 %v206
    %v464 = vunpack.c.l.b16 %v207
    %v465 = vunpack.c.l.b16 %v208
    %v466 = vunpack.c.l.b16 %v209
    %v467 = vunpack.c.l.b16 %v210
    %v468 = vunpack.c.l.b16 %v211
    %v469 = vunpack.c.l.b16 %v212
    %v470 = vunpack.c.l.b16 %v213
    %v471 = vunpack.c.l.b16 %v214
    %v472 = vunpack.c.l.b16 %v215
    %v473 = vunpack.c.l.b16 %v216
    %v474 = vunpack.c.l.b16 %v217
    %v475 = vunpack.c.l.b16 %v218
    %v476 = vunpack.c.l.b16 %v219
    %v477 = vunpack.c.l.b16 %v220
    %v478 = vunpack.c.l.b16 %v221
    %v479 = vunpack.c.l.b16 %v222
    %v480 = vunpack.c.l.b16 %v223
    %v481 = vunpack.c.l.b16 %v224
    %v482 = vunpack.c.l.b16 %v225
    %v483 = vunpack.c.l.b16 %v226
    %v484 = vunpack.c.l.b16 %v227
    %v485 = vunpack.c.l.b16 %v228
    %v486 = vunpack.c.l.b16 %v229
    %v487 = vunpack.c.l.b16 %v230
    %v488 = vunpack.c.l.b16 %v231
    %v489 = vunpack.c.l.b16 %v232
    %v490 = vunpack.c.l.b16 %v233
    %v491 = vunpack.c.l.b16 %v234
    %v492 = vunpack.c.l.b16 %v235
    %v493 = vunpack.c.l.b16 %v236
    %v494 = vunpack.c.l.b16 %v237
    %v495 = vunpack.c.l.b16 %v238
    %v496 = vunpack.c.l.b16 %v239
    %v497 = vunpack.c.l.b16 %v240
    %v498 = vunpack.c.l.b16 %v241
    %v499 = vunpack.c.l.b16 %v242
    %v500 = vunpack.c.l.b16 %v243
    %v501 = vunpack.c.l.b16 %v244
    %v502 = vunpack.c.l.b16 %v245
    %v503 = vunpack.c.l.b16 %v246
    %v504 = vunpack.c.l.b16 %v247
    %v505 = vunpack.c.l.b16 %v248
    %v506 = vunpack.c.l.b16 %v249
    %v507 = vunpack.c.l.b16 %v250
    %v508 = vunpack.c.l.b16 %v251
    %v509 = vunpack.c.l.b16 %v252
    %v510 = vunpack.c.l.b16 %v253
    %v511 = vunpack.c.l.b16 %v254
    %v512 = vunpack.c.l.b16 %v255
    %v513 = vunpack.c.l.b16 %v256
    %v514 = vunpack.c.l.b16 %v257
    %v515 = vunpack.c.l.b16 %v258
    %v516 = vunpack.c.l.b16 %v259
    %v517 = vunpack.c.l.b16 %v260
    %v518 = vunpack.c.l.b16 %v261
    %v519 = vunpack.c.l.b16 %v262
    %v520 = vunpack.c.l.b16 %v263
    %v521 = vunpack.c.l.b16 %v264
    %v522 = vunpack.c.l.b16 %v265
    %v523 = vunpack.c.l.b16 %v266
    %v524 = vunpack.c.l.b16 %v267
    %v525 = vunpack.c.l.b16 %v268
    %v526 = vunpack.c.l.b16 %v269
    %v527 = vunpack.c.l.b16 %v270
    %v528 = vunpack.c.l.b16 %v271
    %v529 = vunpack.c.l.b16 %v272
    %v530 = vunpack.c.l.b16 %v273
    %v531 = vunpack.c.l.b16 %v274
    %v532 = vunpack.c.l.b16 %v275
    %v533 = vunpack.c.l.b16 %v276
    %v534 = vunpack.c.l.b16 %v277
    %v535 = vunpack.c.l.b16 %v278
    %v536 = vunpack.c.l.b16 %v279
    %v537 = vunpack.c.l.b16 %v280
    %v538 = vunpack.c.l.b16 %v281
    %v539 = vunpack.c.l.b16 %v282
    %v540 = vunpack.c.l.b16 %v283
    %v541 = vunpack.c.l.b16 %v284
    %v542 = vunpack.c.l.b16 %v285
    %v543 = vunpack.c.l.b16 %v286
    %v544 = vunpack.c.l.b16 %v287
    %v545 = vunpack.c.l.b16 %v288
    %v546 = vunpack.c.l.b16 %v289
    %v547 = vunpack.c.l.b16 %v290
    %v548 = vunpack.c.l.b16 %v291
    %v549 = vunpack.c.l.b16 %v292
    %v550 = vpack.c.b16 %v423, %v422
    %v551 = vpack.c.b16 %v425, %v424
    %v552 = vpack.c.b16 %v427, %v426
    %v553 = vpack.c.b16 %v429, %v428
    %v554 = vpack.c.b16 %v431, %v430
    %v555 = vpack.c.b16 %v433, %v432
    %v556 = vpack.c.b16 %v435, %v434
    %v557 = vpack.c.b16 %v437, %v436
    %v558 = vpack.c.b16 %v439, %v438
    %v559 = vpack.c.b16 %v441, %v440
    %v560 = vpack.c.b16 %v443, %v442
    %v561 = vpack.c.b16 %v445, %v444
    %v562 = vpack.c.b16 %v447, %v446
    %v563 = vpack.c.b16 %v449, %v448
    %v564 = vpack.c.b16 %v451, %v450
    %v565 = vpack.c.b16 %v453, %v452
    %v566 = vpack.c.b16 %v455, %v454
    %v567 = vpack.c.b16 %v457, %v456
    %v568 = vpack.c.b16 %v459, %v458
    %v569 = vpack.c.b16 %v461, %v460
    %v570 = vpack.c.b16 %v463, %v462
    %v571 = vpack.c.b16 %v465, %v464
    %v572 = vpack.c.b16 %v467, %v466
    %v573 = vpack.c.b16 %v469, %v468
    %v574 = vpack.c.b16 %v471, %v470
    %v575 = vpack.c.b16 %v473, %v472
    %v576 = vpack.c.b16 %v475, %v474
    %v577 = vpack.c.b16 %v477, %v476
    %v578 = vpack.c.b16 %v479, %v478
    %v579 = vpack.c.b16 %v481, %v480
    %v580 = vpack.c.b16 %v483, %v482
    %v581 = vpack.c.b16 %v485, %v484
    %v582 = vpack.c.b16 %v487, %v486
    %v583 = vpack.c.b16 %v489, %v488
    %v584 = vpack.c.b16 %v491, %v490
    %v585 = vpack.c.b16 %v493, %v492
    %v586 = vpack.c.b16 %v495, %v494
    %v587 = vpack.c.b16 %v497, %v496
    %v588 = vpack.c.b16 %v499, %v498
    %v589 = vpack.c.b16 %v501, %v500
    %v590 = vpack.c.b16 %v503, %v502
    %v591 = vpack.c.b16 %v505, %v504
    %v592 = vpack.c.b16 %v507, %v506
    %v593 = vpack.c.b16 %v509, %v508
    %v594 = vpack.c.b16 %v511, %v510
    %v595 = vpack.c.b16 %v513, %v512
    %v596 = vpack.c.b16 %v515, %v514
    %v597 = vpack.c.b16 %v517, %v516
    %v598 = vpack.c.b16 %v519, %v518
    %v599 = vpack.c.b16 %v521, %v520
    %v600 = vpack.c.b16 %v523, %v522
    %v601 = vpack.c.b16 %v525, %v524
    %v602 = vpack.c.b16 %v527, %v526
    %v603 = vpack.c.b16 %v529, %v528
    %v604 = vpack.c.b16 %v531, %v530
    %v605 = vpack.c.b16 %v533, %v532
    %v606 = vpack.c.b16 %v535, %v534
    %v607 = vpack.c.b16 %v537, %v536
    %v608 = vpack.c.b16 %v539, %v538
    %v609 = vpack.c.b16 %v541, %v540
    %v610 = vpack.c.b16 %v543, %v542
    %v611 = vpack.c.b16 %v545, %v544
    %v612 = vpack.c.b16 %v547, %v546
    %v613 = vpack.c.b16 %v549, %v548
    %678 = vmatprep.subr.bf16.mxu0 0
    %679 = vmatpush1.bf16.msra.mxu0 %v557
    %680 = vmatprep.subr.bf16.mxu0 0
    %681 = vmatpush1.bf16.msra.mxu0 %v556
    %682 = vmatprep.subr.bf16.mxu0 0
    %683 = vmatpush1.bf16.msra.mxu0 %v555
    %684 = vmatprep.subr.bf16.mxu0 0
    %685 = vmatpush1.bf16.msra.mxu0 %v554
    %686 = vmatprep.subr.bf16.mxu0 0
    %687 = vmatpush1.bf16.msra.mxu0 %v553
    %688 = vmatprep.subr.bf16.mxu0 0
    %689 = vmatpush1.bf16.msra.mxu0 %v552
    %690 = vmatprep.subr.bf16.mxu0 0
    %691 = vmatpush1.bf16.msra.mxu0 %v551
    %692 = vmatprep.subr.bf16.mxu0 0
    %693 = vmatpush1.bf16.msra.mxu0 %v550
    %694 = vmatprep.subr.bf16.mxu0 0
    %695 = vmatpush2.bf16.msra.mxu0 %v565
    %696 = vmatprep.subr.bf16.mxu0 0
    %697 = vmatpush2.bf16.msra.mxu0 %v564
    %698 = vmatprep.subr.bf16.mxu0 0
    %699 = vmatpush2.bf16.msra.mxu0 %v563
    %700 = vmatprep.subr.bf16.mxu0 0
    %701 = vmatpush2.bf16.msra.mxu0 %v562
    %702 = vmatprep.subr.bf16.mxu0 0
    %703 = vmatpush2.bf16.msra.mxu0 %v561
    %704 = vmatprep.subr.bf16.mxu0 0
    %705 = vmatpush2.bf16.msra.mxu0 %v560
    %706 = vmatprep.subr.bf16.mxu0 0
    %707 = vmatpush2.bf16.msra.mxu0 %v559
    %708 = vmatprep.subr.bf16.mxu0 0
    %709 = vmatpush2.bf16.msra.mxu0 %v558
    %710 = vmatprep.mubr.bf16.mxu0 %v153
    %711 = vmatmul.mubr.bf16.gmra.mxu0 %v152
    %v712 = vpop.f32.mrf.mxu0
    %v713 = vadd.f32 0.0, %v712
    %v714 = vpop.f32.mrf.mxu0
    %v715 = vpop.f32.mrf.mxu0
    %v716 = vpop.f32.mrf.mxu0
    %717 = vdwg.mxu0
    %718 = vmatprep.subr.bf16.mxu0 0
    %719 = vmatpush1.bf16.msra.mxu0 %v573
    %720 = vmatprep.subr.bf16.mxu0 0
    %721 = vmatpush1.bf16.msra.mxu0 %v572
    %722 = vmatprep.subr.bf16.mxu0 0
    %723 = vmatpush1.bf16.msra.mxu0 %v571
    %724 = vmatprep.subr.bf16.mxu0 0
    %725 = vmatpush1.bf16.msra.mxu0 %v570
    %726 = vmatprep.subr.bf16.mxu0 0
    %727 = vmatpush1.bf16.msra.mxu0 %v569
    %728 = vmatprep.subr.bf16.mxu0 0
    %729 = vmatpush1.bf16.msra.mxu0 %v568
    %730 = vmatprep.subr.bf16.mxu0 0
    %731 = vmatpush1.bf16.msra.mxu0 %v567
    %732 = vmatprep.subr.bf16.mxu0 0
    %733 = vmatpush1.bf16.msra.mxu0 %v566
    %734 = vmatprep.subr.bf16.mxu0 0
    %735 = vmatpush2.bf16.msra.mxu0 %v581
    %736 = vmatprep.subr.bf16.mxu0 0
    %737 = vmatpush2.bf16.msra.mxu0 %v580
    %738 = vmatprep.subr.bf16.mxu0 0
    %739 = vmatpush2.bf16.msra.mxu0 %v579
    %740 = vmatprep.subr.bf16.mxu0 0
    %741 = vmatpush2.bf16.msra.mxu0 %v578
    %742 = vmatprep.subr.bf16.mxu0 0
    %743 = vmatpush2.bf16.msra.mxu0 %v577
    %744 = vmatprep.subr.bf16.mxu0 0
    %745 = vmatpush2.bf16.msra.mxu0 %v576
    %746 = vmatprep.subr.bf16.mxu0 0
    %747 = vmatpush2.bf16.msra.mxu0 %v575
    %748 = vmatprep.subr.bf16.mxu0 0
    %749 = vmatpush2.bf16.msra.mxu0 %v574
    %750 = vmatprep.mubr.bf16.mxu0 %v155
    %751 = vmatmul.mubr.bf16.gmra.mxu0 %v154
    %v752 = vpop.f32.mrf.mxu0
    %v753 = vadd.f32 %v713, %v752
    %v754 = vpop.f32.mrf.mxu0
    %v755 = vpop.f32.mrf.mxu0
    %v756 = vpop.f32.mrf.mxu0
    %757 = vdwg.mxu0
    %758 = vmatprep.subr.bf16.mxu0 0
    %759 = vmatpush1.bf16.msra.mxu0 %v589
    %760 = vmatprep.subr.bf16.mxu0 0
    %761 = vmatpush1.bf16.msra.mxu0 %v588
    %762 = vmatprep.subr.bf16.mxu0 0
    %763 = vmatpush1.bf16.msra.mxu0 %v587
    %764 = vmatprep.subr.bf16.mxu0 0
    %765 = vmatpush1.bf16.msra.mxu0 %v586
    %766 = vmatprep.subr.bf16.mxu0 0
    %767 = vmatpush1.bf16.msra.mxu0 %v585
    %768 = vmatprep.subr.bf16.mxu0 0
    %769 = vmatpush1.bf16.msra.mxu0 %v584
    %770 = vmatprep.subr.bf16.mxu0 0
    %771 = vmatpush1.bf16.msra.mxu0 %v583
    %772 = vmatprep.subr.bf16.mxu0 0
    %773 = vmatpush1.bf16.msra.mxu0 %v582
    %774 = vmatprep.subr.bf16.mxu0 0
    %775 = vmatpush2.bf16.msra.mxu0 %v597
    %776 = vmatprep.subr.bf16.mxu0 0
    %777 = vmatpush2.bf16.msra.mxu0 %v596
    %778 = vmatprep.subr.bf16.mxu0 0
    %779 = vmatpush2.bf16.msra.mxu0 %v595
    %780 = vmatprep.subr.bf16.mxu0 0
    %781 = vmatpush2.bf16.msra.mxu0 %v594
    %782 = vmatprep.subr.bf16.mxu0 0
    %783 = vmatpush2.bf16.msra.mxu0 %v593
    %784 = vmatprep.subr.bf16.mxu0 0
    %785 = vmatpush2.bf16.msra.mxu0 %v592
    %786 = vmatprep.subr.bf16.mxu0 0
    %787 = vmatpush2.bf16.msra.mxu0 %v591
    %788 = vmatprep.subr.bf16.mxu0 0
    %789 = vmatpush2.bf16.msra.mxu0 %v590
    %790 = vmatprep.mubr.bf16.mxu0 %v157
    %791 = vmatmul.mubr.bf16.gmra.mxu0 %v156
    %v792 = vpop.f32.mrf.mxu0
    %v793 = vadd.f32 %v753, %v792
    %v794 = vpop.f32.mrf.mxu0
    %v795 = vpop.f32.mrf.mxu0
    %v796 = vpop.f32.mrf.mxu0
    %797 = vdwg.mxu0
    %798 = vmatprep.subr.bf16.mxu0 0
    %799 = vmatpush1.bf16.msra.mxu0 %v605
    %800 = vmatprep.subr.bf16.mxu0 0
    %801 = vmatpush1.bf16.msra.mxu0 %v604
    %802 = vmatprep.subr.bf16.mxu0 0
    %803 = vmatpush1.bf16.msra.mxu0 %v603
    %804 = vmatprep.subr.bf16.mxu0 0
    %805 = vmatpush1.bf16.msra.mxu0 %v602
    %806 = vmatprep.subr.bf16.mxu0 0
    %807 = vmatpush1.bf16.msra.mxu0 %v601
    %808 = vmatprep.subr.bf16.mxu0 0
    %809 = vmatpush1.bf16.msra.mxu0 %v600
    %810 = vmatprep.subr.bf16.mxu0 0
    %811 = vmatpush1.bf16.msra.mxu0 %v599
    %812 = vmatprep.subr.bf16.mxu0 0
    %813 = vmatpush1.bf16.msra.mxu0 %v598
    %814 = vmatprep.subr.bf16.mxu0 0
    %815 = vmatpush2.bf16.msra.mxu0 %v613
    %816 = vmatprep.subr.bf16.mxu0 0
    %817 = vmatpush2.bf16.msra.mxu0 %v612
    %818 = vmatprep.subr.bf16.mxu0 0
    %819 = vmatpush2.bf16.msra.mxu0 %v611
    %820 = vmatprep.subr.bf16.mxu0 0
    %821 = vmatpush2.bf16.msra.mxu0 %v610
    %822 = vmatprep.subr.bf16.mxu0 0
    %823 = vmatpush2.bf16.msra.mxu0 %v609
    %824 = vmatprep.subr.bf16.mxu0 0
    %825 = vmatpush2.bf16.msra.mxu0 %v608
    %826 = vmatprep.subr.bf16.mxu0 0
    %827 = vmatpush2.bf16.msra.mxu0 %v607
    %828 = vmatprep.subr.bf16.mxu0 0
    %829 = vmatpush2.bf16.msra.mxu0 %v606
    %830 = vmatprep.mubr.bf16.mxu0 %v159
    %831 = vmatmul.mubr.bf16.gmra.mxu0 %v158
    %v832 = vpop.f32.mrf.mxu0
    %v833 = vadd.f32 %v793, %v832
    %v834 = vpop.f32.mrf.mxu0
    %v835 = vpop.f32.mrf.mxu0
    %v836 = vpop.f32.mrf.mxu0
    %837 = vdwg.mxu0
    %v838 = vadd.f32 %v293, %v833
    %839 = vst [vmem:[#allocation2] sm:$0xff] %v838
    // Predicated region
    $region34: #{tpu_custom_call.1} parent=1 // pred_check
      %p840 = pneg %p51
    $region35: #{tpu_custom_call.1} parent=1 // pred_check_branch
      %842 = sbr.rel (%p840) target = $region37
    $region36: #{tpu_custom_call.1} parent=1 // pred_region
      %v843 = vld [vmem:[#allocation2] sm:$0xff]
      %v844 = vld [vmem:[%s2] sm:$0x1]
      %v846 = vlaneseq
      %v847 = vshrl.u32 %v846, 7
      %v848 = vsub.s32 0, %v847
      %v849 = vrot.slane %v844, %v848
      %v851 = vadd.f32 %v843, %v849
      %v852 = vmax.f32 %v851, 0.0
      %v853 = vld [vmem:[%s3] sm:$0x1]
      %v855 = vlaneseq
      %v856 = vshrl.u32 %v855, 7
      %v857 = vsub.s32 0, %v856
      %v858 = vrot.slane %v853, %v857
      %v860 = vmul.f32 %v852, %v858
      %861 = vadd.xlane.f32.xlu0 %v860
      %v862 = vpop.xlane.xlu0 %861
      %s863 = sld [smem:[#allocation3]]
      %v864 = vstv %s863
      %v865 = vadd.f32 %v862, %v864
      %v866 = vmax.f32 %v865, 0.0
      %v867 = vand.u32 2147483647, %v865
      %v868 = vsub.f32 0.0, %v867
      %v869 = vmul.f32 %v868, 1.442695
      %v870 = vpow.pop %v869
      %v871 = vadd.f32 %v870, 1.0
      %v872 = vlog2.pop %v871
      %v873 = vmul.f32 %v872, 0.6931472
      %v874 = vadd.f32 %v866, %v873
      %s875 = smul.u32 0, 8
      %v876 = vlaneseq
      %v877 = vshrl.u32 %v876, 7
      %v878 = vstv %s875
      %v879 = vadd.s32 %v878, %v877
      %vm880 = vcmp.lt.s32.totalorder %v879, 2
      %v881 = vsel %vm880, %v874, 0.0
      %vm882 = vcmask 7168
      %v883 = vsel %vm882, %v881, 0.0
      %884 = vadd.xlane.f32.xlu0 %v883
      %v885 = vpop.xlane.xlu0 %884
      %v886 = vrot.slane %v885, 4
      %v887 = vadd.f32 %v885, %v886
      %v888 = vrot.slane %v887, 2
      %v889 = vadd.f32 %v887, %v888
      %v890 = vrot.slane %v889, 1
      %v891 = vadd.f32 %v889, %v890
      %s892 = vtos %v891
      %v893 = vstv %s892
      %894 = vst [vmem:[#allocation9] sm:$0xff] %v893
    $region37: #{tpu_custom_call.1} parent=1 // pred_fallthru
      _
    // Predicated region
    $region38: #{tpu_custom_call.1} parent=1 // pred_check
      _
    $region39: #{tpu_custom_call.1} parent=1 // pred_check_branch
      %896 = sbr.rel (0) target = $region41
    $region40: #{tpu_custom_call.1} parent=1 // pred_region
      %s898 = ssub.s32 128, 128
      %899 = vsyncadd [#allocation6], %s898
      %s901 = sshll.u32 [#allocation9], 4
      %s902 = int_to_ptr.vmem [resolvable:$true] %s901
      %904 = dma.vmem_to_hbm [thread:$0]  %s902, 128, %s5, [#allocation6]
    $region41: #{tpu_custom_call.1} parent=1 // pred_fallthru
      _
    // Predicated region
    $region42: #{tpu_custom_call.1} parent=1 // pred_check
      _
    $region43: #{tpu_custom_call.1} parent=1 // pred_check_branch
      %906 = sbr.rel (0) target = $region45
    $region44: #{tpu_custom_call.1} parent=1 // pred_region
      %907 = dma.done [#allocation6], 128
    $region45: #{tpu_custom_call.1} parent=1 // pred_fallthru
      _
    %908 = vsyncpa [#allocation5], 1
    %909 = vsyncpa [#allocation8], 1
    %910 = vsyncpa [#allocation6], 1

</llo_original>
